<compile_context>
chip_gen: v6e
topology: v6e:2x2x1
jax: 0.10.0
libtpu: 0.0.40
codegen_flags: <defaults>
</compile_context>

<pallas_src>
import functools

import jax
import jax.numpy as jnp
from jax.experimental import pallas as pl
from jax.experimental.pallas import tpu as pltpu

_LANE = 128


def _round_up(x, m):
    return ((x + m - 1) // m) * m


def _critic_mlp_kernel(num_hidden, compute_dtype, value_head, x_ref, *refs):
    """refs = (w1, b1, ..., wH, bH, w_last, b_last, out_ref).

    Hidden layers: Linear + ReLU on the MXU in `compute_dtype` with f32
    accumulation; all elementwise math stays f32.  The value head (out_dim==1)
    is a VPU multiply by the broadcast weight row + lane-sum reduce -> (tm, 1).
    """
    out_ref = refs[-1]
    h = x_ref[...]
    for li in range(num_hidden):
        w = refs[2 * li][...]
        b = refs[2 * li + 1][...]
        h = jnp.dot(h.astype(compute_dtype), w,
                    preferred_element_type=jnp.float32) + b
        h = jnp.maximum(h, 0.0)                      # ReLU on hidden layers only
    w_last = refs[2 * num_hidden][...]
    b_last = refs[2 * num_hidden + 1][...]
    if value_head:
        v = jnp.sum(h.astype(jnp.float32) * w_last, axis=-1, keepdims=True) + b_last
    else:
        v = jnp.dot(h.astype(compute_dtype), w_last,
                    preferred_element_type=jnp.float32) + b_last
    out_ref[...] = v.astype(out_ref.dtype)


def _reference_critic(x, weights, biases):
    """Pure-JAX reference mirroring the PyTorch CriticNet forward (f32)."""
    h = x.astype(jnp.float32)
    for i, (w, b) in enumerate(zip(weights, biases)):
        h = h @ w.astype(jnp.float32) + b.astype(jnp.float32).reshape(1, -1)
        if i < len(weights) - 1:
            h = jnp.maximum(h, 0.0)
    return h


def critic_forward(x, weights, biases, *, tile_rows=4096, compute_dtype=None,
                   xla_fallback_rows=1024):
    """Pallas wrapper for CriticNet.forward.

    x:       [rows, state_dim + n_agents] (f32 or bf16)
    weights: list of [in, out] (transposed nn.Linear weights)
    biases:  list of [out] or [1, out]
    Returns: [rows, 1] float32 critic values.
    """
    rows, in_dim = x.shape
    num_layers = len(weights)
    out_dim = weights[-1].shape[1]
    assert num_layers >= 1

    # Small-batch fallback: pallas_call + DMA-prime overhead cannot be
    # amortized at the module's typical batch*n_agents row counts.
    if rows < xla_fallback_rows:
        return _reference_critic(x, weights, biases)

    if compute_dtype is None:
        compute_dtype = x.dtype            # stream x as-is; cast in-kernel only
    compute_dtype = jnp.dtype(compute_dtype)

    value_head = (out_dim == 1)
    num_hidden = num_layers - 1

    # Hidden-layer weights go to the MXU in compute_dtype (tiny, cast once);
    # biases and the value-head weight row stay f32 (VPU/add path).
    ws = [w.astype(compute_dtype) for w in weights[:num_hidden]]
    bs = [b.astype(jnp.float32).reshape(1, -1) for b in biases[:num_hidden]]
    if value_head:
        w_last = weights[-1].astype(jnp.float32).reshape(1, -1)    # [1, H]
        b_last = biases[-1].astype(jnp.float32).reshape(1, 1)
    else:
        w_last = weights[-1].astype(compute_dtype)
        b_last = biases[-1].astype(jnp.float32).reshape(1, -1)

    # Row tiling: sublane packing of the streamed x tile (8 for f32, 16 bf16).
    sub = max(8, 32 // jnp.dtype(x.dtype).itemsize)
    rows_sub = _round_up(rows, sub)
    tm = min(_round_up(tile_rows, sub), rows_sub)
    # v7x megacore: make sure the parallel row axis has >= 2 grid steps when
    # there is enough work, so both TensorCores engage.
    if rows_sub >= 2048 and rows_sub // tm < 2:
        tm = _round_up(pl.cdiv(rows_sub, 2), sub)
    rows_pad = _round_up(rows_sub, tm)
    x_in = x if rows_pad == rows else jnp.pad(x, ((0, rows_pad - rows), (0, 0)))
    grid = (rows_pad // tm,)

    # Activation/output blocks follow the grid; weights/biases stay resident.
    in_specs = [pl.BlockSpec((tm, in_dim), lambda i: (i, 0))]
    wb_inputs = []
    for w, b in zip(ws, bs):
        wb_inputs += [w, b]
        in_specs += [pl.BlockSpec(w.shape, lambda i: (0, 0)),
                     pl.BlockSpec(b.shape, lambda i: (0, 0))]
    wb_inputs += [w_last, b_last]
    in_specs += [pl.BlockSpec(w_last.shape, lambda i: (0, 0)),
                 pl.BlockSpec(b_last.shape, lambda i: (0, 0))]
    out_spec = pl.BlockSpec((tm, out_dim), lambda i: (i, 0))

    # Honest cost estimate (no padding).
    dims = [in_dim] + [int(w.shape[1]) for w in weights]
    flops = 2 * rows_pad * sum(dims[i] * dims[i + 1] for i in range(num_layers))
    bytes_accessed = (
        rows_pad * in_dim * x_in.dtype.itemsize
        + sum(int(a.size) * a.dtype.itemsize for a in wb_inputs)
        + rows_pad * out_dim * 4)

    # VMEM budget: streamed blocks are lane-padded to 128 and double-buffered.
    vmem_est = 2 * tm * _round_up(in_dim, _LANE) * x_in.dtype.itemsize
    vmem_est += 2 * tm * _round_up(out_dim, _LANE) * 4
    for a in wb_inputs:
        vmem_est += (_round_up(int(a.shape[0]), 8)
                     * _round_up(int(a.shape[1]), _LANE) * a.dtype.itemsize)
    vmem_limit = None
    if vmem_est > 28 * 1024 * 1024:          # beyond the default scoped limit
        vmem_limit = min(int(vmem_est * 2), 100 * 1024 * 1024)

    kernel = functools.partial(_critic_mlp_kernel, num_hidden, compute_dtype,
                               value_head)

    out = pl.pallas_call(
        kernel,
        out_shape=jax.ShapeDtypeStruct((rows_pad, out_dim), jnp.float32),
        grid=grid,
        in_specs=in_specs,
        out_specs=out_spec,
        compiler_params=pltpu.CompilerParams(
            dimension_semantics=("parallel",),
            vmem_limit_bytes=vmem_limit),
        cost_estimate=pl.CostEstimate(
            flops=flops, transcendentals=0, bytes_accessed=bytes_accessed),
    )(x_in, *wb_inputs)

    return out[:rows]


if __name__ == "__main__":
    # Small shapes consistent with the module.
    state_dim = 32
    n_agents = 3
    hidden_sizes = [64, 64]
    batch = 2
    rows = batch * n_agents                  # CriticNet applied per (batch, agent)
    in_dim = state_dim + n_agents            # critic input = concat(state, agent one-hot)

    key = jax.random.PRNGKey(0)
    keys = jax.random.split(key, 10)

    dims = [in_dim] + list(hidden_sizes) + [1]
    weights, biases = [], []
    for li in range(len(dims) - 1):
        weights.append(
            0.1 * jax.random.normal(keys[li], (dims[li], dims[li + 1]), jnp.float32))
        biases.append(
            0.1 * jax.random.normal(keys[3 + li], (1, dims[li + 1]), jnp.float32))

    # --- tiny batch: default dispatch falls back to XLA (intended fast path) ---
    x = jax.random.normal(keys[6], (rows, in_dim), jnp.float32)
    ref = _reference_critic(x, weights, biases)
    v_auto = jax.block_until_ready(critic_forward(x, weights, biases))
    assert v_auto.shape == (rows, 1)
    assert jnp.allclose(v_auto, ref, atol=1e-5, rtol=1e-5), "auto-dispatch mismatch"

    # --- tiny batch, Pallas forced: single ragged tile (6 rows -> 8 sublanes) ---
    v_tiny = jax.block_until_ready(
        critic_forward(x, weights, biases, xla_fallback_rows=0))
    assert v_tiny.shape == (rows, 1)
    assert jnp.allclose(v_tiny, ref, atol=1e-4, rtol=1e-4), "tiny Pallas mismatch"

    # --- large batch, f32: default tile triggers the >=2-grid-step split ------
    x_big = jax.random.normal(keys[7], (4096, in_dim), jnp.float32)
    ref_big = _reference_critic(x_big, weights, biases)
    v_big = jax.block_until_ready(
        critic_forward(x_big, weights, biases, xla_fallback_rows=0))
    assert v_big.shape == (4096, 1)
    assert jnp.allclose(v_big, ref_big, atol=1e-4, rtol=1e-4), "tiled f32 mismatch"

    # --- ragged rows, caller-provided bf16 activations (bf16 MXU path) --------
    x_rag = jax.random.normal(keys[8], (1000, in_dim), jnp.float32)
    ref_rag = _reference_critic(x_rag, weights, biases)
    v_bf16 = jax.block_until_ready(
        critic_forward(x_rag.astype(jnp.bfloat16), weights, biases,
                       tile_rows=256, xla_fallback_rows=0))
    assert v_bf16.shape == (1000, 1)
    assert jnp.allclose(v_bf16, ref_rag, atol=3e-2, rtol=3e-2), "bf16 mismatch"

    print("KERNEL_OK")
</pallas_src>

<mosaic_0001>
module attributes {stable_mosaic.version = 11 : i64} {
  func.func @_critic_mlp_kernel(%arg0: i32, %arg1: memref<8x35xf32, #tpu.memory_space<vmem>>, %arg2: memref<35x64xf32, #tpu.memory_space<vmem>>, %arg3: memref<1x64xf32, #tpu.memory_space<vmem>>, %arg4: memref<64x64xf32, #tpu.memory_space<vmem>>, %arg5: memref<1x64xf32, #tpu.memory_space<vmem>>, %arg6: memref<1x64xf32, #tpu.memory_space<vmem>>, %arg7: memref<1x1xf32, #tpu.memory_space<vmem>>, %arg8: memref<8x1xf32, #tpu.memory_space<vmem>>) attributes {dimension_semantics = [#tpu.dimension_semantics<parallel>], iteration_bounds = array<i64: 1>, scalar_prefetch = 0 : i64, scratch_operands = 0 : i64, tpu.core_type = #tpu.core_type<tc>, window_params = [{transform_indices = @transform_0, window_bounds = array<i64: 8, 35>}, {pipeline_mode = #tpu.pipeline_mode<synchronous>, transform_indices = @transform_1, window_bounds = array<i64: 35, 64>}, {pipeline_mode = #tpu.pipeline_mode<synchronous>, transform_indices = @transform_2, window_bounds = array<i64: 1, 64>}, {pipeline_mode = #tpu.pipeline_mode<synchronous>, transform_indices = @transform_3, window_bounds = array<i64: 64, 64>}, {pipeline_mode = #tpu.pipeline_mode<synchronous>, transform_indices = @transform_4, window_bounds = array<i64: 1, 64>}, {pipeline_mode = #tpu.pipeline_mode<synchronous>, transform_indices = @transform_5, window_bounds = array<i64: 1, 64>}, {pipeline_mode = #tpu.pipeline_mode<synchronous>, transform_indices = @transform_6, window_bounds = array<i64: 1, 1>}, {transform_indices = @transform_7, window_bounds = array<i64: 8, 1>}]} {
    %c0 = arith.constant 0 : index
    %c0_0 = arith.constant 0 : index
    %0 = vector.load %arg1[%c0, %c0_0] : memref<8x35xf32, #tpu.memory_space<vmem>>, vector<8x35xf32>
    %c0_1 = arith.constant 0 : index
    %c0_2 = arith.constant 0 : index
    %1 = vector.load %arg2[%c0_1, %c0_2] : memref<35x64xf32, #tpu.memory_space<vmem>>, vector<35x64xf32>
    %c0_3 = arith.constant 0 : index
    %c0_4 = arith.constant 0 : index
    %2 = vector.load %arg3[%c0_3, %c0_4] : memref<1x64xf32, #tpu.memory_space<vmem>>, vector<1x64xf32>
    %cst = arith.constant dense<0.000000e+00> : vector<8x64xf32>
    %3 = tpu.matmul %0, %1, %cst {dimension_numbers = #tpu.dot_dimension_numbers<[1], [0], [0], [1], [0, 0, 1, 1], [], []>} : vector<8x35xf32>, vector<35x64xf32>, vector<8x64xf32> -> vector<8x64xf32>
    %4 = vector.broadcast %2 : vector<1x64xf32> to vector<8x64xf32>
    %5 = arith.addf %3, %4 : vector<8x64xf32>
    %cst_5 = arith.constant 0.000000e+00 : f32
    %6 = vector.broadcast %cst_5 : f32 to vector<8x64xf32>
    %7 = arith.maximumf %5, %6 : vector<8x64xf32>
    %c0_6 = arith.constant 0 : index
    %c0_7 = arith.constant 0 : index
    %8 = vector.load %arg4[%c0_6, %c0_7] : memref<64x64xf32, #tpu.memory_space<vmem>>, vector<64x64xf32>
    %c0_8 = arith.constant 0 : index
    %c0_9 = arith.constant 0 : index
    %9 = vector.load %arg5[%c0_8, %c0_9] : memref<1x64xf32, #tpu.memory_space<vmem>>, vector<1x64xf32>
    %cst_10 = arith.constant dense<0.000000e+00> : vector<8x64xf32>
    %10 = tpu.matmul %7, %8, %cst_10 {dimension_numbers = #tpu.dot_dimension_numbers<[1], [0], [0], [1], [0, 0, 1, 1], [], []>} : vector<8x64xf32>, vector<64x64xf32>, vector<8x64xf32> -> vector<8x64xf32>
    %11 = vector.broadcast %9 : vector<1x64xf32> to vector<8x64xf32>
    %12 = arith.addf %10, %11 : vector<8x64xf32>
    %cst_11 = arith.constant 0.000000e+00 : f32
    %13 = vector.broadcast %cst_11 : f32 to vector<8x64xf32>
    %14 = arith.maximumf %12, %13 : vector<8x64xf32>
    %c0_12 = arith.constant 0 : index
    %c0_13 = arith.constant 0 : index
    %15 = vector.load %arg6[%c0_12, %c0_13] : memref<1x64xf32, #tpu.memory_space<vmem>>, vector<1x64xf32>
    %c0_14 = arith.constant 0 : index
    %c0_15 = arith.constant 0 : index
    %16 = vector.load %arg7[%c0_14, %c0_15] : memref<1x1xf32, #tpu.memory_space<vmem>>, vector<1x1xf32>
    %17 = vector.broadcast %15 : vector<1x64xf32> to vector<8x64xf32>
    %18 = arith.mulf %14, %17 : vector<8x64xf32>
    %cst_16 = arith.constant dense<0.000000e+00> : vector<8xf32>
    %19 = vector.multi_reduction <add>, %18, %cst_16 [1] : vector<8x64xf32> to vector<8xf32>
    %20 = vector.shape_cast %19 : vector<8xf32> to vector<8x1xf32>
    %21 = vector.broadcast %16 : vector<1x1xf32> to vector<8x1xf32>
    %22 = arith.addf %20, %21 : vector<8x1xf32>
    %c0_17 = arith.constant 0 : index
    %c0_18 = arith.constant 0 : index
    %23 = vector.load %arg8[%c0_17, %c0_18] : memref<8x1xf32, #tpu.memory_space<vmem>>, vector<8x1xf32>
    tpu.vector_store %arg8[%c0_17, %c0_18], %22 {strides = array<i32>} : memref<8x1xf32, #tpu.memory_space<vmem>>, vector<8x1xf32>,
    return
  }
  func.func @transform_0(%arg0: i32) -> (i32, i32) {
    %c0_i32 = arith.constant 0 : i32
    %c0_i32_0 = arith.constant 0 : i32
    return %arg0, %c0_i32 : i32, i32
  }
  func.func @transform_1(%arg0: i32) -> (i32, i32) {
    %c0_i32 = arith.constant 0 : i32
    %c0_i32_0 = arith.constant 0 : i32
    %c0_i32_1 = arith.constant 0 : i32
    return %c0_i32, %c0_i32_0 : i32, i32
  }
  func.func @transform_2(%arg0: i32) -> (i32, i32) {
    %c0_i32 = arith.constant 0 : i32
    %c0_i32_0 = arith.constant 0 : i32
    %c0_i32_1 = arith.constant 0 : i32
    return %c0_i32, %c0_i32_0 : i32, i32
  }
  func.func @transform_3(%arg0: i32) -> (i32, i32) {
    %c0_i32 = arith.constant 0 : i32
    %c0_i32_0 = arith.constant 0 : i32
    %c0_i32_1 = arith.constant 0 : i32
    return %c0_i32, %c0_i32_0 : i32, i32
  }
  func.func @transform_4(%arg0: i32) -> (i32, i32) {
    %c0_i32 = arith.constant 0 : i32
    %c0_i32_0 = arith.constant 0 : i32
    %c0_i32_1 = arith.constant 0 : i32
    return %c0_i32, %c0_i32_0 : i32, i32
  }
  func.func @transform_5(%arg0: i32) -> (i32, i32) {
    %c0_i32 = arith.constant 0 : i32
    %c0_i32_0 = arith.constant 0 : i32
    %c0_i32_1 = arith.constant 0 : i32
    return %c0_i32, %c0_i32_0 : i32, i32
  }
  func.func @transform_6(%arg0: i32) -> (i32, i32) {
    %c0_i32 = arith.constant 0 : i32
    %c0_i32_0 = arith.constant 0 : i32
    %c0_i32_1 = arith.constant 0 : i32
    return %c0_i32, %c0_i32_0 : i32, i32
  }
  func.func @transform_7(%arg0: i32) -> (i32, i32) {
    %c0_i32 = arith.constant 0 : i32
    %c0_i32_0 = arith.constant 0 : i32
    return %arg0, %c0_i32 : i32, i32
  }
}

</mosaic_0001>

<llo_original>
// kernel: tpu_custom_call.1
$region0: #{tpu_custom_call.1}
  #allocation0 [shape = 'u32[]', space=smem, size = 0x4, offset = 0x4, fixed_abs, tag = 'smem constant byte address 0x4 - core index']
  #allocation1 [shape = 'u32[144,128]{1,0:T(1,128)}', space=vmem, size = 0x12000, scoped, tag = 'internal scratch']
  #allocation2 [shape = 'f32[1,1]{1,0:T(1,128)S(1)}', space=vmem, size = 0x200, scoped, tag = 'scoped memory for tpu_custom_call.1']
  %s0 = inlined_call_operand.hbm [shape: f32[8,35], index: 0, kind: input, shape index: {}]
  %s1 = inlined_call_operand.hbm [shape: f32[35,64], index: 1, kind: input, shape index: {}]
  %s2 = inlined_call_operand.vmem [shape: f32[1,64], index: 2, kind: input, shape index: {}]
  %s3 = inlined_call_operand.hbm [shape: f32[64,64], index: 3, kind: input, shape index: {}]
  %s4 = inlined_call_operand.vmem [shape: f32[1,64], index: 4, kind: input, shape index: {}]
  %s5 = inlined_call_operand.vmem [shape: f32[1,64], index: 5, kind: input, shape index: {}]
  %s6 = inlined_call_operand.<no memory space> [shape: f32[1,1], index: 6, kind: input, shape index: {}]
  %s7 = inlined_call_operand.vmem [shape: f32[8,1], index: 7, kind: output, shape index: {}]
  %s8 = sld [smem:[#allocation0]]
  $region50: #{tpu_custom_call.1} parent=0
    _
  %s10 = ssub.s32 1, %s8
  %s11 = scalar_select 0, %s10, %s8
  %v12 = vstv %s6
  %13 = vst [vmem:[#allocation2] sm:$0x1] %v12
  $region1: #{tpu_custom_call.1} parent=0
    #allocation3 [shape = 'u8[4096]{0}', space=vmem, size = 0x1000, scoped, tag = 'input window, operand 0, single buffered']
    #allocation4 [shape = 's32[1]{0}', space=sflag, size = 0x4, scoped, tag = 'scoped memory for tpu_custom_call.1']
    #allocation5 [shape = 'u8[20480]{0}', space=vmem, size = 0x5000, scoped, tag = 'input window, operand 1, single buffered']
    #allocation6 [shape = 's32[1]{0}', space=sflag, size = 0x4, scoped, tag = 'scoped memory for tpu_custom_call.1']
    #allocation7 [shape = 'u8[32768]{0}', space=vmem, size = 0x8000, scoped, tag = 'input window, operand 3, single buffered']
    %14 = vsyncpa [#allocation4], 0
    %15 = vsyncpa [#allocation6], 0
    // Predicated region
    $region2: #{tpu_custom_call.1} parent=1 // pred_check
      _
    $region3: #{tpu_custom_call.1} parent=1 // pred_check_branch
      %17 = sbr.rel (0) target = $region5
    $region4: #{tpu_custom_call.1} parent=1 // pred_region
      %s19 = ssub.s32 128, 128
      %20 = vsyncadd [#allocation4], %s19
      %s22 = sshll.u32 [#allocation3], 4
      %s23 = int_to_ptr.vmem [resolvable:$true] %s22
      %25 = dma.hbm_to_vmem [thread:$0]  %s0, 128, %s23, [#allocation4]
    $region5: #{tpu_custom_call.1} parent=1 // pred_fallthru
      _
    // Predicated region
    $region6: #{tpu_custom_call.1} parent=1 // pred_check
      _
    $region7: #{tpu_custom_call.1} parent=1 // pred_check_branch
      %27 = sbr.rel (0) target = $region9
    $region8: #{tpu_custom_call.1} parent=1 // pred_region
      %s29 = ssub.s32 640, 640
      %30 = vsyncadd [#allocation6], %s29
      %s31 = sshll.u32 [#allocation5], 4
      %s32 = int_to_ptr.vmem [resolvable:$true] %s31
      %37 = dma.hbm_to_vmem [thread:$0]  %s1, 640, %s32, [#allocation6], 128, 128, 8
    $region9: #{tpu_custom_call.1} parent=1 // pred_fallthru
      _
    // Predicated region
    $region10: #{tpu_custom_call.1} parent=1 // pred_check
      _
    $region11: #{tpu_custom_call.1} parent=1 // pred_check_branch
      %39 = sbr.rel (0) target = $region13
    $region12: #{tpu_custom_call.1} parent=1 // pred_region
      _
    $region13: #{tpu_custom_call.1} parent=1 // pred_fallthru
      _
    // Predicated region
    $region14: #{tpu_custom_call.1} parent=1 // pred_check
      _
    $region15: #{tpu_custom_call.1} parent=1 // pred_check_branch
      %41 = sbr.rel (0) target = $region17
    $region16: #{tpu_custom_call.1} parent=1 // pred_region
      %s43 = ssub.s32 1024, 1024
      %44 = vsyncadd [#allocation6], %s43
      %s45 = sshll.u32 [#allocation7], 4
      %s46 = int_to_ptr.vmem [resolvable:$true] %s45
      %51 = dma.hbm_to_vmem [thread:$0]  %s3, 1024, %s46, [#allocation6], 128, 128, 8
    $region17: #{tpu_custom_call.1} parent=1 // pred_fallthru
      _
    // Predicated region
    $region18: #{tpu_custom_call.1} parent=1 // pred_check
      _
    $region19: #{tpu_custom_call.1} parent=1 // pred_check_branch
      %53 = sbr.rel (0) target = $region21
    $region20: #{tpu_custom_call.1} parent=1 // pred_region
      _
    $region21: #{tpu_custom_call.1} parent=1 // pred_fallthru
      _
    // Predicated region
    $region22: #{tpu_custom_call.1} parent=1 // pred_check
      _
    $region23: #{tpu_custom_call.1} parent=1 // pred_check_branch
      %55 = sbr.rel (0) target = $region25
    $region24: #{tpu_custom_call.1} parent=1 // pred_region
      _
    $region25: #{tpu_custom_call.1} parent=1 // pred_fallthru
      _
    // Predicated region
    $region26: #{tpu_custom_call.1} parent=1 // pred_check
      _
    $region27: #{tpu_custom_call.1} parent=1 // pred_check_branch
      %57 = sbr.rel (0) target = $region29
    $region28: #{tpu_custom_call.1} parent=1 // pred_region
      _
    $region29: #{tpu_custom_call.1} parent=1 // pred_fallthru
      _
    // Predicated region
    $region30: #{tpu_custom_call.1} parent=1 // pred_check
      _
    $region31: #{tpu_custom_call.1} parent=1 // pred_check_branch
      %59 = sbr.rel (0) target = $region33
    $region32: #{tpu_custom_call.1} parent=1 // pred_region
      %60 = dma.done [#allocation4], 128
    $region33: #{tpu_custom_call.1} parent=1 // pred_fallthru
      _
    // Predicated region
    $region34: #{tpu_custom_call.1} parent=1 // pred_check
      _
    $region35: #{tpu_custom_call.1} parent=1 // pred_check_branch
      %62 = sbr.rel (0) target = $region37
    $region36: #{tpu_custom_call.1} parent=1 // pred_region
      %63 = dma.done [#allocation6], 640
    $region37: #{tpu_custom_call.1} parent=1 // pred_fallthru
      _
    // Predicated region
    $region38: #{tpu_custom_call.1} parent=1 // pred_check
      _
    $region39: #{tpu_custom_call.1} parent=1 // pred_check_branch
      %65 = sbr.rel (0) target = $region41
    $region40: #{tpu_custom_call.1} parent=1 // pred_region
      %66 = dma.done [#allocation6], 1024
    $region41: #{tpu_custom_call.1} parent=1 // pred_fallthru
      _
    %v67 = vld [vmem:[#allocation3] sm:$0xff]
    %v68 = vld [vmem:[#allocation5] sm:$0xff]
    %v69 = vld [vmem:[#allocation5 + $0x8] sm:$0xff]
    %v70 = vld [vmem:[#allocation5 + $0x10] sm:$0xff]
    %v71 = vld [vmem:[#allocation5 + $0x18] sm:$0xff]
    %v72 = vld [vmem:[#allocation5 + $0x20] sm:$0x7]
    %v73 = vld [vmem:[%s2] sm:$0x1]
    %v75 = vlaneseq
    %v76 = vshrl.u32 %v75, 7
    %v77 = vsub.s32 0, %v76
    %v78 = vrot.slane %v73, %v77
    %vm80 = vcmask 285696
    %v82 = vsel %vm80, %v67, 0
    %vm84 = vcmask 1042432
    %v86 = vsel %vm84, %v72, 0
    %88 = vmatprep.subr.mxu0 0.0
    %89 = vmatpush1.msra.mxu0 0.0
    %90 = vmatprep.subr.mxu0 0.0
    %91 = vmatpush1.msra.mxu0 0.0
    %92 = vmatprep.subr.mxu0 0.0
    %93 = vmatpush1.msra.mxu0 0.0
    %94 = vmatprep.subr.mxu0 0.0
    %95 = vmatpush1.msra.mxu0 0.0
    %96 = vmatprep.subr.mxu0 0.0
    %97 = vmatpush1.msra.mxu0 0.0
    %98 = vmatprep.subr.mxu0 0.0
    %99 = vmatpush1.msra.mxu0 0.0
    %100 = vmatprep.subr.mxu0 0.0
    %101 = vmatpush1.msra.mxu0 0.0
    %102 = vmatprep.subr.mxu0 0.0
    %103 = vmatpush1.msra.mxu0 0.0
    %104 = vmatprep.subr.mxu0 0.0
    %105 = vmatpush1.msra.mxu0 0.0
    %106 = vmatprep.subr.mxu0 0.0
    %107 = vmatpush1.msra.mxu0 0.0
    %108 = vmatprep.subr.mxu0 0.0
    %109 = vmatpush1.msra.mxu0 0.0
    %110 = vmatprep.subr.mxu0 0.0
    %111 = vmatpush1.msra.mxu0 %v86
    %112 = vmatprep.subr.mxu0 0.0
    %113 = vmatpush1.msra.mxu0 %v71
    %114 = vmatprep.subr.mxu0 0.0
    %115 = vmatpush1.msra.mxu0 %v70
    %116 = vmatprep.subr.mxu0 0.0
    %117 = vmatpush1.msra.mxu0 %v69
    %118 = vmatprep.subr.mxu0 0.0
    %119 = vmatpush1.msra.mxu0 %v68
    %120 = vmatprep.subr.mxu0 0.0
    %121 = vmatpush2.msra.mxu0 0.0
    %122 = vmatprep.subr.mxu0 0.0
    %123 = vmatpush2.msra.mxu0 0.0
    %124 = vmatprep.subr.mxu0 0.0
    %125 = vmatpush2.msra.mxu0 0.0
    %126 = vmatprep.subr.mxu0 0.0
    %127 = vmatpush2.msra.mxu0 0.0
    %128 = vmatprep.subr.mxu0 0.0
    %129 = vmatpush2.msra.mxu0 0.0
    %130 = vmatprep.subr.mxu0 0.0
    %131 = vmatpush2.msra.mxu0 0.0
    %132 = vmatprep.subr.mxu0 0.0
    %133 = vmatpush2.msra.mxu0 0.0
    %134 = vmatprep.subr.mxu0 0.0
    %135 = vmatpush2.msra.mxu0 0.0
    %136 = vmatprep.subr.mxu0 0.0
    %137 = vmatpush2.msra.mxu0 0.0
    %138 = vmatprep.subr.mxu0 0.0
    %139 = vmatpush2.msra.mxu0 0.0
    %140 = vmatprep.subr.mxu0 0.0
    %141 = vmatpush2.msra.mxu0 0.0
    %142 = vmatprep.subr.mxu0 0.0
    %143 = vmatpush2.msra.mxu0 0.0
    %144 = vmatprep.subr.mxu0 0.0
    %145 = vmatpush2.msra.mxu0 0.0
    %146 = vmatprep.subr.mxu0 0.0
    %147 = vmatpush2.msra.mxu0 0.0
    %148 = vmatprep.subr.mxu0 0.0
    %149 = vmatpush2.msra.mxu0 0.0
    %150 = vmatprep.subr.mxu0 0.0
    %151 = vmatpush2.msra.mxu0 0.0
    %152 = vmatprep.mubr.f32.mxu0 0.0
    %153 = vmatmul.mubr.f32.gmra.mxu0 %v82
    %v154 = vpop.f32.mrf.mxu0
    %v155 = vadd.f32 %v78, %v154
    %v156 = vpop.f32.mrf.mxu0
    %157 = vdwg.mxu0
    %v158 = vmax.f32 %v155, 0.0
    %v159 = vld [vmem:[#allocation7] sm:$0xff]
    %v160 = vld [vmem:[#allocation7 + $0x8] sm:$0xff]
    %v161 = vld [vmem:[#allocation7 + $0x10] sm:$0xff]
    %v162 = vld [vmem:[#allocation7 + $0x18] sm:$0xff]
    %v163 = vld [vmem:[#allocation7 + $0x20] sm:$0xff]
    %v164 = vld [vmem:[#allocation7 + $0x28] sm:$0xff]
    %v165 = vld [vmem:[#allocation7 + $0x30] sm:$0xff]
    %v166 = vld [vmem:[#allocation7 + $0x38] sm:$0xff]
    %v167 = vld [vmem:[%s4] sm:$0x1]
    %v169 = vlaneseq
    %v170 = vshrl.u32 %v169, 7
    %v171 = vsub.s32 0, %v170
    %v172 = vrot.slane %v167, %v171
    %vm174 = vcmask 523264
    %v176 = vsel %vm174, %v158, 0
    %178 = vmatprep.subr.mxu0 0.0
    %179 = vmatpush1.msra.mxu0 0.0
    %180 = vmatprep.subr.mxu0 0.0
    %181 = vmatpush1.msra.mxu0 0.0
    %182 = vmatprep.subr.mxu0 0.0
    %183 = vmatpush1.msra.mxu0 0.0
    %184 = vmatprep.subr.mxu0 0.0
    %185 = vmatpush1.msra.mxu0 0.0
    %186 = vmatprep.subr.mxu0 0.0
    %187 = vmatpush1.msra.mxu0 0.0
    %188 = vmatprep.subr.mxu0 0.0
    %189 = vmatpush1.msra.mxu0 0.0
    %190 = vmatprep.subr.mxu0 0.0
    %191 = vmatpush1.msra.mxu0 0.0
    %192 = vmatprep.subr.mxu0 0.0
    %193 = vmatpush1.msra.mxu0 0.0
    %194 = vmatprep.subr.mxu0 0.0
    %195 = vmatpush1.msra.mxu0 %v166
    %196 = vmatprep.subr.mxu0 0.0
    %197 = vmatpush1.msra.mxu0 %v165
    %198 = vmatprep.subr.mxu0 0.0
    %199 = vmatpush1.msra.mxu0 %v164
    %200 = vmatprep.subr.mxu0 0.0
    %201 = vmatpush1.msra.mxu0 %v163
    %202 = vmatprep.subr.mxu0 0.0
    %203 = vmatpush1.msra.mxu0 %v162
    %204 = vmatprep.subr.mxu0 0.0
    %205 = vmatpush1.msra.mxu0 %v161
    %206 = vmatprep.subr.mxu0 0.0
    %207 = vmatpush1.msra.mxu0 %v160
    %208 = vmatprep.subr.mxu0 0.0
    %209 = vmatpush1.msra.mxu0 %v159
    %210 = vmatprep.subr.mxu0 0.0
    %211 = vmatpush2.msra.mxu0 0.0
    %212 = vmatprep.subr.mxu0 0.0
    %213 = vmatpush2.msra.mxu0 0.0
    %214 = vmatprep.subr.mxu0 0.0
    %215 = vmatpush2.msra.mxu0 0.0
    %216 = vmatprep.subr.mxu0 0.0
    %217 = vmatpush2.msra.mxu0 0.0
    %218 = vmatprep.subr.mxu0 0.0
    %219 = vmatpush2.msra.mxu0 0.0
    %220 = vmatprep.subr.mxu0 0.0
    %221 = vmatpush2.msra.mxu0 0.0
    %222 = vmatprep.subr.mxu0 0.0
    %223 = vmatpush2.msra.mxu0 0.0
    %224 = vmatprep.subr.mxu0 0.0
    %225 = vmatpush2.msra.mxu0 0.0
    %226 = vmatprep.subr.mxu0 0.0
    %227 = vmatpush2.msra.mxu0 0.0
    %228 = vmatprep.subr.mxu0 0.0
    %229 = vmatpush2.msra.mxu0 0.0
    %230 = vmatprep.subr.mxu0 0.0
    %231 = vmatpush2.msra.mxu0 0.0
    %232 = vmatprep.subr.mxu0 0.0
    %233 = vmatpush2.msra.mxu0 0.0
    %234 = vmatprep.subr.mxu0 0.0
    %235 = vmatpush2.msra.mxu0 0.0
    %236 = vmatprep.subr.mxu0 0.0
    %237 = vmatpush2.msra.mxu0 0.0
    %238 = vmatprep.subr.mxu0 0.0
    %239 = vmatpush2.msra.mxu0 0.0
    %240 = vmatprep.subr.mxu0 0.0
    %241 = vmatpush2.msra.mxu0 0.0
    %242 = vmatprep.mubr.f32.mxu0 0.0
    %243 = vmatmul.mubr.f32.gmra.mxu0 %v176
    %v244 = vpop.f32.mrf.mxu0
    %v245 = vadd.f32 %v172, %v244
    %v246 = vpop.f32.mrf.mxu0
    %247 = vdwg.mxu0
    %v248 = vmax.f32 %v245, 0.0
    %v249 = vld [vmem:[%s5] sm:$0x1]
    %v250 = vld [vmem:[#allocation2] sm:$0x1]
    %v252 = vlaneseq
    %v253 = vshrl.u32 %v252, 7
    %v254 = vsub.s32 0, %v253
    %v255 = vrot.slane %v249, %v254
    %v257 = vmul.f32 %v248, %v255
    %v258 = vsel %vm174, %v257, 0.0
    %259 = vadd.xlane.f32.xlu0 %v258
    %v260 = vpop.xlane.xlu0 %259
    %v262 = vlaneseq
    %v263 = vshrl.u32 %v262, 7
    %v264 = vsub.s32 0, %v263
    %v265 = vrot.slane %v250, %v264
    %v267 = vadd.f32 %v260, %v265
    %vm268 = vcmask 7168
    %269 = vst.msk [vmem:[%s7] sm:$0xff] %vm268, %v267
    // Predicated region
    $region42: #{tpu_custom_call.1} parent=1 // pred_check
      _
    $region43: #{tpu_custom_call.1} parent=1 // pred_check_branch
      %271 = sbr.rel (0) target = $region45
    $region44: #{tpu_custom_call.1} parent=1 // pred_region
      _
    $region45: #{tpu_custom_call.1} parent=1 // pred_fallthru
      _
    // Predicated region
    $region46: #{tpu_custom_call.1} parent=1 // pred_check
      _
    $region47: #{tpu_custom_call.1} parent=1 // pred_check_branch
      %273 = sbr.rel (0) target = $region49
    $region48: #{tpu_custom_call.1} parent=1 // pred_region
      _
    $region49: #{tpu_custom_call.1} parent=1 // pred_fallthru
      _
    %274 = vsyncpa [#allocation4], 1
    %275 = vsyncpa [#allocation6], 1

</llo_original>
